<compile_context>
chip_gen: v7x
topology: tpu7x:2x2x1
jax: 0.10.0
libtpu: 0.0.40
codegen_flags: <defaults>
</compile_context>

<pallas_src>
import functools

import jax
import jax.numpy as jnp
from jax.experimental import pallas as pl
from jax.experimental.pallas import tpu as pltpu


def _patch_nce_kernel(q_ref, k_ref, loss_ref, m_ref, l_ref, pos_ref, *,
                      inv_t: float, neg_fill: float):
    # q_ref block: (Bt, Tr, dim); k_ref block: (Bt, Tc, dim)
    # loss_ref block: (Bt, 1, Tr); scratch m/l/pos: (Bt, Tr) f32
    col = pl.program_id(2)
    n_col = pl.num_programs(2)

    @pl.when(col == 0)
    def _():
        m_ref[...] = jnp.full_like(m_ref, -jnp.inf)
        l_ref[...] = jnp.zeros_like(l_ref)
        pos_ref[...] = jnp.zeros_like(pos_ref)

    # Fold temperature into q in its native dtype; keep MXU inputs un-upcast.
    q = q_ref[...] * inv_t                      # (Bt, Tr, dim), native dtype
    k = k_ref[...]                              # (Bt, Tc, dim), native dtype
    tr = q.shape[1]
    tc = k.shape[1]

    # Batched scores on the MXU with f32 accumulation:
    #   s[b, p, c] = <q_bp, k_bc> / T
    s = jnp.einsum(
        "bpd,bqd->bpq", q, k, preferred_element_type=jnp.float32
    )                                           # (Bt, Tr, Tc) f32

    # Diagonal mask in *global* (within-batch) patch coordinates.
    row_base = pl.program_id(1) * tr
    col_base = col * tc
    r_idx = jax.lax.broadcasted_iota(jnp.int32, (tr, tc), 0) + row_base
    c_idx = jax.lax.broadcasted_iota(jnp.int32, (tr, tc), 1) + col_base
    eye = (r_idx == c_idx)[None]                # (1, Tr, Tc)

    # Positive logit (already temperature-scaled) = diagonal of s; the diagonal
    # element of a row lives in exactly one column tile, so accumulation is a
    # plain sum across column tiles.
    pos_ref[...] += jnp.sum(jnp.where(eye, s, 0.0), axis=-1)        # (Bt, Tr)

    # Negative logits: diagonal masked with -10/T (== masked_fill(-10) then /T).
    neg = jnp.where(eye, jnp.float32(neg_fill), s)                  # (Bt, Tr, Tc)

    # Online (flash-style) logsumexp over the negative logits.
    m_prev = m_ref[...]
    m_new = jnp.maximum(m_prev, jnp.max(neg, axis=-1))              # (Bt, Tr)
    l_ref[...] = l_ref[...] * jnp.exp(m_prev - m_new) + jnp.sum(
        jnp.exp(neg - m_new[..., None]), axis=-1
    )
    m_ref[...] = m_new

    @pl.when(col == n_col - 1)
    def _():
        pos = pos_ref[...]
        m = m_ref[...]
        m_f = jnp.maximum(m, pos)
        total = l_ref[...] * jnp.exp(m - m_f) + jnp.exp(pos - m_f)
        loss = m_f + jnp.log(total) - pos                           # (Bt, Tr)
        loss_ref[...] = loss[:, None, :].astype(loss_ref.dtype)


def _pick_patch_tile(npatches: int, max_tile: int) -> int:
    """Tile for the patch axes: the full axis if small enough, else the largest
    divisor of npatches that is a multiple of 128 and <= max_tile (keeps the
    output lane-dense and BlockSpec-legal)."""
    if npatches <= max_tile:
        return npatches
    best = None
    for t in range(128, max_tile + 1, 128):
        if npatches % t == 0:
            best = t
    return best if best is not None else npatches


def _pick_batch_tile(B, tr, tc, dim, in_itemsize, budget_bytes=24 * 1024 * 1024):
    """Largest divisor Bt of B whose per-step working set fits the VMEM budget."""
    best = 1
    for bt in range(1, B + 1):
        if B % bt:
            continue
        use = (
            2 * bt * tr * dim * in_itemsize     # q block, double-buffered
            + 2 * bt * tc * dim * in_itemsize   # k block, double-buffered
            + 2 * bt * tr * 4                   # f32 output block, double-buffered
            + 4 * bt * tr * tc * 4              # f32 scores + masked/exp temps
            + 3 * bt * tr * 4                   # m / l / pos scratch
        )
        if use <= budget_bytes:
            best = bt
    return best


def patch_nce_loss(
    feat_q,
    feat_k,
    *,
    patch_batch_size: int,
    nce_T: float,
    nce_includes_all_negatives_from_minibatch: bool = False,
    max_tile: int = 512,
):
    """Pallas implementation of PatchNCELoss.forward.

    feat_q, feat_k: (num_patches, dim). Returns per-sample loss (num_patches,)
    in float32, matching torch.nn.CrossEntropyLoss(reduction='none').
    """
    num_patches, dim = feat_q.shape
    feat_k = jax.lax.stop_gradient(feat_k)  # feat_k.detach()

    if nce_includes_all_negatives_from_minibatch:
        batch_dim_for_bmm = 1
    else:
        batch_dim_for_bmm = patch_batch_size

    assert num_patches % batch_dim_for_bmm == 0
    npatches = num_patches // batch_dim_for_bmm

    q3 = feat_q.reshape(batch_dim_for_bmm, npatches, dim)
    k3 = feat_k.reshape(batch_dim_for_bmm, npatches, dim)

    tr = _pick_patch_tile(npatches, max_tile)
    tc = _pick_patch_tile(npatches, max_tile)
    bt = _pick_batch_tile(batch_dim_for_bmm, tr, tc, dim, q3.dtype.itemsize)
    grid = (batch_dim_for_bmm // bt, npatches // tr, npatches // tc)

    inv_t = float(1.0 / nce_T)
    kernel = functools.partial(
        _patch_nce_kernel, inv_t=inv_t, neg_fill=float(-10.0 * inv_t)
    )

    loss3 = pl.pallas_call(
        kernel,
        out_shape=jax.ShapeDtypeStruct(
            (batch_dim_for_bmm, 1, npatches), jnp.float32
        ),
        grid_spec=pltpu.PrefetchScalarGridSpec(
            num_scalar_prefetch=0,
            grid=grid,
            in_specs=[
                pl.BlockSpec((bt, tr, dim), lambda b, r, c: (b, r, 0)),
                pl.BlockSpec((bt, tc, dim), lambda b, r, c: (b, c, 0)),
            ],
            out_specs=pl.BlockSpec((bt, 1, tr), lambda b, r, c: (b, 0, r)),
            scratch_shapes=[pltpu.VMEM((bt, tr), jnp.float32)] * 3,
        ),
        compiler_params=pltpu.CompilerParams(
            dimension_semantics=("parallel", "parallel", "arbitrary"),
            vmem_limit_bytes=32 * 1024 * 1024,
        ),
    )(q3, k3)

    # Flat order (b, p) -> b*npatches + p matches the PyTorch view(-1, npatches).
    return loss3.reshape(num_patches)


def _reference_patch_nce_loss(feat_q, feat_k, *, patch_batch_size, nce_T,
                              nce_includes_all_negatives_from_minibatch=False):
    # Pure-JAX reference mirroring the PyTorch code, for validation.
    num_patches, dim = feat_q.shape
    feat_k = jax.lax.stop_gradient(feat_k)
    l_pos = jnp.sum(feat_q * feat_k, axis=1, keepdims=True)
    B = 1 if nce_includes_all_negatives_from_minibatch else patch_batch_size
    q3 = feat_q.reshape(B, -1, dim)
    k3 = feat_k.reshape(B, -1, dim)
    npatches = q3.shape[1]
    l_neg = jnp.einsum("bpd,bqd->bpq", q3, k3)
    eye = jnp.eye(npatches, dtype=bool)[None]
    l_neg = jnp.where(eye, -10.0, l_neg).reshape(-1, npatches)
    out = jnp.concatenate([l_pos, l_neg], axis=1) / nce_T
    # cross entropy with target 0, reduction='none'
    return jax.nn.logsumexp(out, axis=1) - out[:, 0]


if __name__ == "__main__":
    # Config (args.train.params.*): synthetic, deterministic.
    patch_batch_size = 2
    nce_T = 0.07

    key = jax.random.PRNGKey(0)
    kq, kk = jax.random.split(key)

    # Case 1: per-image negatives (B = patch_batch_size), single-tile path.
    npatches = 64
    dim = 32
    num_patches = patch_batch_size * npatches  # 128
    feat_q = jax.random.normal(kq, (num_patches, dim), dtype=jnp.float32)
    feat_k = jax.random.normal(kk, (num_patches, dim), dtype=jnp.float32)

    loss = jax.block_until_ready(
        patch_nce_loss(
            feat_q, feat_k,
            patch_batch_size=patch_batch_size, nce_T=nce_T,
        )
    )
    ref = _reference_patch_nce_loss(
        feat_q, feat_k, patch_batch_size=patch_batch_size, nce_T=nce_T
    )
    assert loss.shape == (num_patches,)
    assert jnp.allclose(loss, ref, rtol=1e-5, atol=1e-4), (loss, ref)

    # Case 2: all negatives from minibatch (B = 1, npatches = num_patches).
    loss_all = jax.block_until_ready(
        patch_nce_loss(
            feat_q, feat_k,
            patch_batch_size=patch_batch_size, nce_T=nce_T,
            nce_includes_all_negatives_from_minibatch=True,
        )
    )
    ref_all = _reference_patch_nce_loss(
        feat_q, feat_k, patch_batch_size=patch_batch_size, nce_T=nce_T,
        nce_includes_all_negatives_from_minibatch=True,
    )
    assert jnp.allclose(loss_all, ref_all, rtol=1e-5, atol=1e-4), (loss_all, ref_all)

    # Case 3: exercise the streamed (multi row/col tile) online-logsumexp path
    # by capping the tile size below npatches.
    npatches3 = 256
    fq3 = jax.random.normal(kq, (npatches3, dim), dtype=jnp.float32)
    fk3 = jax.random.normal(kk, (npatches3, dim), dtype=jnp.float32)
    loss3 = jax.block_until_ready(
        patch_nce_loss(fq3, fk3, patch_batch_size=1, nce_T=nce_T, max_tile=128)
    )
    ref3 = _reference_patch_nce_loss(fq3, fk3, patch_batch_size=1, nce_T=nce_T)
    assert jnp.allclose(loss3, ref3, rtol=1e-5, atol=1e-4), (loss3, ref3)

    print("KERNEL_OK")
</pallas_src>

<mosaic_0001>
module attributes {stable_mosaic.version = 11 : i64} {
  func.func @_patch_nce_kernel(%arg0: i32, %arg1: i32, %arg2: i32, %arg3: memref<2x64x32xf32, #tpu.memory_space<vmem>>, %arg4: memref<2x64x32xf32, #tpu.memory_space<vmem>>, %arg5: memref<2x1x64xf32, #tpu.memory_space<vmem>>, %arg6: memref<2x64xf32, #tpu.memory_space<vmem>>, %arg7: memref<2x64xf32, #tpu.memory_space<vmem>>, %arg8: memref<2x64xf32, #tpu.memory_space<vmem>>) attributes {dimension_semantics = [#tpu.dimension_semantics<parallel>, #tpu.dimension_semantics<parallel>, #tpu.dimension_semantics<arbitrary>], iteration_bounds = array<i64: 1, 1, 1>, scalar_prefetch = 0 : i64, scratch_operands = 3 : i64, tpu.core_type = #tpu.core_type<tc>, window_params = [{transform_indices = @transform_0, window_bounds = array<i64: 2, 64, 32>}, {transform_indices = @transform_1, window_bounds = array<i64: 2, 64, 32>}, {transform_indices = @transform_2, window_bounds = array<i64: 2, 1, 64>}]} {
    %c0_i32 = arith.constant 0 : i32
    %0 = arith.cmpi eq, %arg2, %c0_i32 : i32
    %1 = arith.extui %0 : i1 to i32
    %c0_i32_0 = arith.constant 0 : i32
    %2 = arith.cmpi ne, %1, %c0_i32_0 : i32
    scf.if %2 {
      %cst_27 = arith.constant 0xFF800000 : f32
      %48 = vector.broadcast %cst_27 : f32 to vector<2x64xf32>
      %c0_28 = arith.constant 0 : index
      %c0_29 = arith.constant 0 : index
      %49 = vector.load %arg6[%c0_28, %c0_29] : memref<2x64xf32, #tpu.memory_space<vmem>>, vector<2x64xf32>
      tpu.vector_store %arg6[%c0_28, %c0_29], %48 {strides = array<i32>} : memref<2x64xf32, #tpu.memory_space<vmem>>, vector<2x64xf32>,
      %cst_30 = arith.constant 0.000000e+00 : f32
      %50 = vector.broadcast %cst_30 : f32 to vector<2x64xf32>
      %c0_31 = arith.constant 0 : index
      %c0_32 = arith.constant 0 : index
      %51 = vector.load %arg7[%c0_31, %c0_32] : memref<2x64xf32, #tpu.memory_space<vmem>>, vector<2x64xf32>
      tpu.vector_store %arg7[%c0_31, %c0_32], %50 {strides = array<i32>} : memref<2x64xf32, #tpu.memory_space<vmem>>, vector<2x64xf32>,
      %cst_33 = arith.constant 0.000000e+00 : f32
      %52 = vector.broadcast %cst_33 : f32 to vector<2x64xf32>
      %c0_34 = arith.constant 0 : index
      %c0_35 = arith.constant 0 : index
      %53 = vector.load %arg8[%c0_34, %c0_35] : memref<2x64xf32, #tpu.memory_space<vmem>>, vector<2x64xf32>
      tpu.vector_store %arg8[%c0_34, %c0_35], %52 {strides = array<i32>} : memref<2x64xf32, #tpu.memory_space<vmem>>, vector<2x64xf32>,
    } else {
    }
    %c0 = arith.constant 0 : index
    %c0_1 = arith.constant 0 : index
    %c0_2 = arith.constant 0 : index
    %3 = vector.load %arg3[%c0, %c0_1, %c0_2] : memref<2x64x32xf32, #tpu.memory_space<vmem>>, vector<2x64x32xf32>
    %cst = arith.constant 14.2857141 : f32
    %4 = vector.broadcast %cst : f32 to vector<2x64x32xf32>
    %5 = arith.mulf %3, %4 : vector<2x64x32xf32>
    %c0_3 = arith.constant 0 : index
    %c0_4 = arith.constant 0 : index
    %c0_5 = arith.constant 0 : index
    %6 = vector.load %arg4[%c0_3, %c0_4, %c0_5] : memref<2x64x32xf32, #tpu.memory_space<vmem>>, vector<2x64x32xf32>
    "tpu.trace_start"() <{level = 10 : i32, message = "bpd,bqd->bpq"}> : () -> ()
    %cst_6 = arith.constant dense<0.000000e+00> : vector<2x64x64xf32>
    %7 = tpu.matmul %5, %6, %cst_6 {dimension_numbers = #tpu.dot_dimension_numbers<[2], [2], [1], [1], [0, 0, 0, 1, 1, 1], [0], [0]>} : vector<2x64x32xf32>, vector<2x64x32xf32>, vector<2x64x64xf32> -> vector<2x64x64xf32>
    "tpu.trace_stop"() : () -> ()
    %c64_i32 = arith.constant 64 : i32
    %8 = arith.muli %arg1, %c64_i32 : i32
    %c64_i32_7 = arith.constant 64 : i32
    %9 = arith.muli %arg2, %c64_i32_7 : i32
    %10 = tpu.iota {dimensions = array<i32: 0>} : vector<64x64xi32>
    %11 = vector.broadcast %8 : i32 to vector<64x64xi32>
    %12 = arith.addi %10, %11 : vector<64x64xi32>
    %13 = tpu.iota {dimensions = array<i32: 1>} : vector<64x64xi32>
    %14 = vector.broadcast %9 : i32 to vector<64x64xi32>
    %15 = arith.addi %13, %14 : vector<64x64xi32>
    %16 = arith.cmpi eq, %12, %15 : vector<64x64xi32>
    %17 = vector.shape_cast %16 : vector<64x64xi1> to vector<1x64x64xi1>
    %c0_8 = arith.constant 0 : index
    %c0_9 = arith.constant 0 : index
    %18 = vector.load %arg8[%c0_8, %c0_9] : memref<2x64xf32, #tpu.memory_space<vmem>>, vector<2x64xf32>
    %cst_10 = arith.constant 0.000000e+00 : f32
    %19 = vector.shape_cast %17 : vector<1x64x64xi1> to vector<1x64x64xi1>
    %20 = vector.broadcast %19 : vector<1x64x64xi1> to vector<2x64x64xi1>
    %21 = vector.broadcast %cst_10 : f32 to vector<2x64x64xf32>
    %22 = arith.select %20, %7, %21 : vector<2x64x64xi1>, vector<2x64x64xf32>
    %cst_11 = arith.constant dense<0.000000e+00> : vector<2x64xf32>
    %23 = vector.multi_reduction <add>, %22, %cst_11 [2] : vector<2x64x64xf32> to vector<2x64xf32>
    %24 = arith.addf %18, %23 : vector<2x64xf32>
    %c0_12 = arith.constant 0 : index
    %c0_13 = arith.constant 0 : index
    %25 = vector.load %arg8[%c0_12, %c0_13] : memref<2x64xf32, #tpu.memory_space<vmem>>, vector<2x64xf32>
    tpu.vector_store %arg8[%c0_12, %c0_13], %24 {strides = array<i32>} : memref<2x64xf32, #tpu.memory_space<vmem>>, vector<2x64xf32>,
    %cst_14 = arith.constant -142.857147 : f32
    %26 = vector.shape_cast %17 : vector<1x64x64xi1> to vector<1x64x64xi1>
    %27 = vector.broadcast %26 : vector<1x64x64xi1> to vector<2x64x64xi1>
    %28 = vector.broadcast %cst_14 : f32 to vector<2x64x64xf32>
    %29 = arith.select %27, %28, %7 : vector<2x64x64xi1>, vector<2x64x64xf32>
    %c0_15 = arith.constant 0 : index
    %c0_16 = arith.constant 0 : index
    %30 = vector.load %arg6[%c0_15, %c0_16] : memref<2x64xf32, #tpu.memory_space<vmem>>, vector<2x64xf32>
    %cst_17 = arith.constant dense<0xFF800000> : vector<2x64xf32>
    %31 = vector.multi_reduction <maximumf>, %29, %cst_17 [2] : vector<2x64x64xf32> to vector<2x64xf32>
    %32 = arith.maximumf %30, %31 : vector<2x64xf32>
    %c0_18 = arith.constant 0 : index
    %c0_19 = arith.constant 0 : index
    %33 = vector.load %arg7[%c0_18, %c0_19] : memref<2x64xf32, #tpu.memory_space<vmem>>, vector<2x64xf32>
    %34 = arith.subf %30, %32 : vector<2x64xf32>
    %35 = math.exp %34 : vector<2x64xf32>
    %36 = arith.mulf %33, %35 : vector<2x64xf32>
    %37 = vector.shape_cast %32 : vector<2x64xf32> to vector<2x64x1xf32>
    %38 = vector.broadcast %37 : vector<2x64x1xf32> to vector<2x64x64xf32>
    %39 = arith.subf %29, %38 : vector<2x64x64xf32>
    %40 = math.exp %39 : vector<2x64x64xf32>
    %cst_20 = arith.constant dense<0.000000e+00> : vector<2x64xf32>
    %41 = vector.multi_reduction <add>, %40, %cst_20 [2] : vector<2x64x64xf32> to vector<2x64xf32>
    %42 = arith.addf %36, %41 : vector<2x64xf32>
    %c0_21 = arith.constant 0 : index
    %c0_22 = arith.constant 0 : index
    %43 = vector.load %arg7[%c0_21, %c0_22] : memref<2x64xf32, #tpu.memory_space<vmem>>, vector<2x64xf32>
    tpu.vector_store %arg7[%c0_21, %c0_22], %42 {strides = array<i32>} : memref<2x64xf32, #tpu.memory_space<vmem>>, vector<2x64xf32>,
    %c0_23 = arith.constant 0 : index
    %c0_24 = arith.constant 0 : index
    %44 = vector.load %arg6[%c0_23, %c0_24] : memref<2x64xf32, #tpu.memory_space<vmem>>, vector<2x64xf32>
    tpu.vector_store %arg6[%c0_23, %c0_24], %32 {strides = array<i32>} : memref<2x64xf32, #tpu.memory_space<vmem>>, vector<2x64xf32>,
    %c0_i32_25 = arith.constant 0 : i32
    %45 = arith.cmpi eq, %arg2, %c0_i32_25 : i32
    %46 = arith.extui %45 : i1 to i32
    %c0_i32_26 = arith.constant 0 : i32
    %47 = arith.cmpi ne, %46, %c0_i32_26 : i32
    scf.if %47 {
      %c0_27 = arith.constant 0 : index
      %c0_28 = arith.constant 0 : index
      %48 = vector.load %arg8[%c0_27, %c0_28] : memref<2x64xf32, #tpu.memory_space<vmem>>, vector<2x64xf32>
      %c0_29 = arith.constant 0 : index
      %c0_30 = arith.constant 0 : index
      %49 = vector.load %arg6[%c0_29, %c0_30] : memref<2x64xf32, #tpu.memory_space<vmem>>, vector<2x64xf32>
      %50 = arith.maximumf %49, %48 : vector<2x64xf32>
      %c0_31 = arith.constant 0 : index
      %c0_32 = arith.constant 0 : index
      %51 = vector.load %arg7[%c0_31, %c0_32] : memref<2x64xf32, #tpu.memory_space<vmem>>, vector<2x64xf32>
      %52 = arith.subf %49, %50 : vector<2x64xf32>
      %53 = math.exp %52 : vector<2x64xf32>
      %54 = arith.mulf %51, %53 : vector<2x64xf32>
      %55 = arith.subf %48, %50 : vector<2x64xf32>
      %56 = math.exp %55 : vector<2x64xf32>
      %57 = arith.addf %54, %56 : vector<2x64xf32>
      %58 = math.log %57 : vector<2x64xf32>
      %59 = arith.addf %50, %58 : vector<2x64xf32>
      %60 = arith.subf %59, %48 : vector<2x64xf32>
      %61 = vector.shape_cast %60 : vector<2x64xf32> to vector<2x1x64xf32>
      %c0_33 = arith.constant 0 : index
      %c0_34 = arith.constant 0 : index
      %c0_35 = arith.constant 0 : index
      %62 = vector.load %arg5[%c0_33, %c0_34, %c0_35] : memref<2x1x64xf32, #tpu.memory_space<vmem>>, vector<2x1x64xf32>
      tpu.vector_store %arg5[%c0_33, %c0_34, %c0_35], %61 {strides = array<i32>} : memref<2x1x64xf32, #tpu.memory_space<vmem>>, vector<2x1x64xf32>,
    } else {
    }
    return
  }
  func.func @transform_0(%arg0: i32, %arg1: i32, %arg2: i32) -> (i32, i32, i32) {
    %c0_i32 = arith.constant 0 : i32
    %c0_i32_0 = arith.constant 0 : i32
    return %arg0, %arg1, %c0_i32 : i32, i32, i32
  }
  func.func @transform_1(%arg0: i32, %arg1: i32, %arg2: i32) -> (i32, i32, i32) {
    %c0_i32 = arith.constant 0 : i32
    %c0_i32_0 = arith.constant 0 : i32
    return %arg0, %arg2, %c0_i32 : i32, i32, i32
  }
  func.func @transform_2(%arg0: i32, %arg1: i32, %arg2: i32) -> (i32, i32, i32) {
    %c0_i32 = arith.constant 0 : i32
    %c0_i32_0 = arith.constant 0 : i32
    return %arg0, %c0_i32, %arg1 : i32, i32, i32
  }
}

</mosaic_0001>

<llo_original>
// kernel: tpu_custom_call.1
$region0: #{tpu_custom_call.1}
  #allocation0 [shape = 'u32[]', space=smem, size = 0x4, offset = 0x4, fixed_abs, tag = 'smem constant byte address 0x4 - core index']
  #allocation1 [shape = 'u32[144,128]{1,0:T(1,128)}', space=vmem, size = 0x12000, scoped, tag = 'internal scratch']
  #allocation2 [shape = 'f32[2,64]{1,0:T(2,128)}', space=vmem, size = 0x400, scoped, tag = 'scratch operand']
  #allocation3 [shape = 'f32[2,64]{1,0:T(2,128)}', space=vmem, size = 0x400, scoped, tag = 'scratch operand']
  #allocation4 [shape = 'f32[2,64]{1,0:T(2,128)}', space=vmem, size = 0x400, scoped, tag = 'scratch operand']
  %s0 = inlined_call_operand.vmem [shape: f32[2,64,32], index: 0, kind: input, shape index: {}]
  %s1 = inlined_call_operand.vmem [shape: f32[2,64,32], index: 1, kind: input, shape index: {}]
  %s2 = inlined_call_operand.hbm [shape: f32[2,1,64], index: 2, kind: output, shape index: {}]
  %s3 = sld [smem:[#allocation0]]
  $region26: #{tpu_custom_call.1} parent=0
    _
  %s5 = ssub.s32 1, %s3
  %s6 = scalar_select 0, %s5, %s3
  $region1: #{tpu_custom_call.1} parent=0
    #allocation5 [shape = 'u8[1024]{0}', space=vmem, size = 0x400, scoped, tag = 'output window, operand 0, single buffered']
    #allocation6 [shape = 's32[1]{0}', space=sflag, size = 0x4, scoped, tag = 'scoped memory for tpu_custom_call.1']
    %7 = vsyncpa [#allocation6], 0
    // Predicated region
    $region2: #{tpu_custom_call.1} parent=1 // pred_check
      _
    $region3: #{tpu_custom_call.1} parent=1 // pred_check_branch
      %9 = sbr.rel (0) target = $region5
    $region4: #{tpu_custom_call.1} parent=1 // pred_region
      _
    $region5: #{tpu_custom_call.1} parent=1 // pred_fallthru
      _
    // Predicated region
    $region6: #{tpu_custom_call.1} parent=1 // pred_check
      _
    $region7: #{tpu_custom_call.1} parent=1 // pred_check_branch
      %11 = sbr.rel (0) target = $region9
    $region8: #{tpu_custom_call.1} parent=1 // pred_region
      _
    $region9: #{tpu_custom_call.1} parent=1 // pred_fallthru
      _
    %p12 = scmp.eq.s32.totalorder 0, 0
    // Predicated region
    $region10: #{tpu_custom_call.1} parent=1 // pred_check
      %p13 = pneg %p12
    $region11: #{tpu_custom_call.1} parent=1 // pred_check_branch
      %15 = sbr.rel (%p13) target = $region13
    $region12: #{tpu_custom_call.1} parent=1 // pred_region
      %vm16 = vcmask 517120
      %17 = vst.msk [vmem:[#allocation2] sm:$0x3] %vm16, -inf
      %18 = vst.msk [vmem:[#allocation3] sm:$0x3] %vm16, 0.0
      %19 = vst.msk [vmem:[#allocation4] sm:$0x3] %vm16, 0.0
    $region13: #{tpu_custom_call.1} parent=1 // pred_fallthru
      _
    %v20 = vld [vmem:[%s0] sm:$0xff]
    %v21 = vld [vmem:[%s0 + $0x8] sm:$0xff]
    %v22 = vld [vmem:[%s0 + $0x10] sm:$0xff]
    %v23 = vld [vmem:[%s0 + $0x18] sm:$0xff]
    %v24 = vld [vmem:[%s0 + $0x20] sm:$0xff]
    %v25 = vld [vmem:[%s0 + $0x28] sm:$0xff]
    %v26 = vld [vmem:[%s0 + $0x30] sm:$0xff]
    %v27 = vld [vmem:[%s0 + $0x38] sm:$0xff]
    %v28 = vld [vmem:[%s0 + $0x40] sm:$0xff]
    %v29 = vld [vmem:[%s0 + $0x48] sm:$0xff]
    %v30 = vld [vmem:[%s0 + $0x50] sm:$0xff]
    %v31 = vld [vmem:[%s0 + $0x58] sm:$0xff]
    %v32 = vld [vmem:[%s0 + $0x60] sm:$0xff]
    %v33 = vld [vmem:[%s0 + $0x68] sm:$0xff]
    %v34 = vld [vmem:[%s0 + $0x70] sm:$0xff]
    %v35 = vld [vmem:[%s0 + $0x78] sm:$0xff]
    %v36 = vmul.f32 %v20, 14.285714
    %v37 = vmul.f32 %v21, 14.285714
    %v38 = vmul.f32 %v22, 14.285714
    %v39 = vmul.f32 %v23, 14.285714
    %v40 = vmul.f32 %v24, 14.285714
    %v41 = vmul.f32 %v25, 14.285714
    %v42 = vmul.f32 %v26, 14.285714
    %v43 = vmul.f32 %v27, 14.285714
    %v44 = vmul.f32 %v28, 14.285714
    %v45 = vmul.f32 %v29, 14.285714
    %v46 = vmul.f32 %v30, 14.285714
    %v47 = vmul.f32 %v31, 14.285714
    %v48 = vmul.f32 %v32, 14.285714
    %v49 = vmul.f32 %v33, 14.285714
    %v50 = vmul.f32 %v34, 14.285714
    %v51 = vmul.f32 %v35, 14.285714
    %v52 = vld [vmem:[%s1] sm:$0xff]
    %v53 = vld [vmem:[%s1 + $0x8] sm:$0xff]
    %v54 = vld [vmem:[%s1 + $0x10] sm:$0xff]
    %v55 = vld [vmem:[%s1 + $0x18] sm:$0xff]
    %v56 = vld [vmem:[%s1 + $0x20] sm:$0xff]
    %v57 = vld [vmem:[%s1 + $0x28] sm:$0xff]
    %v58 = vld [vmem:[%s1 + $0x30] sm:$0xff]
    %v59 = vld [vmem:[%s1 + $0x38] sm:$0xff]
    %v60 = vld [vmem:[%s1 + $0x40] sm:$0xff]
    %v61 = vld [vmem:[%s1 + $0x48] sm:$0xff]
    %v62 = vld [vmem:[%s1 + $0x50] sm:$0xff]
    %v63 = vld [vmem:[%s1 + $0x58] sm:$0xff]
    %v64 = vld [vmem:[%s1 + $0x60] sm:$0xff]
    %v65 = vld [vmem:[%s1 + $0x68] sm:$0xff]
    %v66 = vld [vmem:[%s1 + $0x70] sm:$0xff]
    %v67 = vld [vmem:[%s1 + $0x78] sm:$0xff]
    %vm68 = vcmask 261120
    %v70 = vsel %vm68, %v36, 0
    %v73 = vsel %vm68, %v37, 0
    %v76 = vsel %vm68, %v38, 0
    %v79 = vsel %vm68, %v39, 0
    %v82 = vsel %vm68, %v40, 0
    %v85 = vsel %vm68, %v41, 0
    %v88 = vsel %vm68, %v42, 0
    %v91 = vsel %vm68, %v43, 0
    %v94 = vsel %vm68, %v52, 0
    %v97 = vsel %vm68, %v53, 0
    %v100 = vsel %vm68, %v54, 0
    %v103 = vsel %vm68, %v55, 0
    %v106 = vsel %vm68, %v56, 0
    %v109 = vsel %vm68, %v57, 0
    %v112 = vsel %vm68, %v58, 0
    %v115 = vsel %vm68, %v59, 0
    %117 = vmatprep.subr.mxu0 0.0
    %118 = vmatpush1.xpose.msra.mxu0 %v94
    %119 = vmatprep.subr.mxu0 0.0
    %120 = vmatpush1.xpose.msra.mxu0 %v97
    %121 = vmatprep.subr.mxu0 0.0
    %122 = vmatpush1.xpose.msra.mxu0 %v100
    %123 = vmatprep.subr.mxu0 0.0
    %124 = vmatpush1.xpose.msra.mxu0 %v103
    %125 = vmatprep.subr.mxu0 0.0
    %126 = vmatpush1.xpose.msra.mxu0 %v106
    %127 = vmatprep.subr.mxu0 0.0
    %128 = vmatpush1.xpose.msra.mxu0 %v109
    %129 = vmatprep.subr.mxu0 0.0
    %130 = vmatpush1.xpose.msra.mxu0 %v112
    %131 = vmatprep.subr.mxu0 0.0
    %132 = vmatpush1.xpose.msra.mxu0 %v115
    %133 = vmatprep.subr.mxu0 0.0
    %134 = vmatpush1.xpose.msra.mxu0 0.0
    %135 = vmatprep.subr.mxu0 0.0
    %136 = vmatpush1.xpose.msra.mxu0 0.0
    %137 = vmatprep.subr.mxu0 0.0
    %138 = vmatpush1.xpose.msra.mxu0 0.0
    %139 = vmatprep.subr.mxu0 0.0
    %140 = vmatpush1.xpose.msra.mxu0 0.0
    %141 = vmatprep.subr.mxu0 0.0
    %142 = vmatpush1.xpose.msra.mxu0 0.0
    %143 = vmatprep.subr.mxu0 0.0
    %144 = vmatpush1.xpose.msra.mxu0 0.0
    %145 = vmatprep.subr.mxu0 0.0
    %146 = vmatpush1.xpose.msra.mxu0 0.0
    %147 = vmatprep.subr.mxu0 0.0
    %148 = vmatpush1.xpose.msra.mxu0 0.0
    %149 = vmatprep.subr.mxu0 0.0
    %150 = vmatpush1.xpose.msra.mxu0 0.0
    %151 = vmatprep.subr.mxu0 0.0
    %152 = vmatpush1.xpose.msra.mxu0 0.0
    %153 = vmatprep.subr.mxu0 0.0
    %154 = vmatpush1.xpose.msra.mxu0 0.0
    %155 = vmatprep.subr.mxu0 0.0
    %156 = vmatpush1.xpose.msra.mxu0 0.0
    %157 = vmatprep.subr.mxu0 0.0
    %158 = vmatpush1.xpose.msra.mxu0 0.0
    %159 = vmatprep.subr.mxu0 0.0
    %160 = vmatpush1.xpose.msra.mxu0 0.0
    %161 = vmatprep.subr.mxu0 0.0
    %162 = vmatpush1.xpose.msra.mxu0 0.0
    %163 = vmatprep.subr.mxu0 0.0
    %164 = vmatpush1.xpose.msra.mxu0 0.0
    %165 = vmatprep.subr.mxu0 0.0
    %166 = vmatpush1.xpose.msra.mxu0 0.0
    %167 = vmatprep.subr.mxu0 0.0
    %168 = vmatpush1.xpose.msra.mxu0 0.0
    %169 = vmatprep.subr.mxu0 0.0
    %170 = vmatpush1.xpose.msra.mxu0 0.0
    %171 = vmatprep.subr.mxu0 0.0
    %172 = vmatpush1.xpose.msra.mxu0 0.0
    %173 = vmatprep.subr.mxu0 0.0
    %174 = vmatpush1.xpose.msra.mxu0 0.0
    %175 = vmatprep.subr.mxu0 0.0
    %176 = vmatpush1.xpose.msra.mxu0 0.0
    %177 = vmatprep.subr.mxu0 0.0
    %178 = vmatpush1.xpose.msra.mxu0 0.0
    %179 = vmatprep.subr.mxu0 0.0
    %180 = vmatpush1.xpose.msra.mxu0 0.0
    %181 = vmatprep.mubr.f32.mxu0 0.0
    %182 = vmatmul.mubr.f32.gmra.mrb[0].mxu0 %v70
    %v183 = vpop.f32.mrb[0].mxu0
    %v184 = vadd.f32 0.0, %v183
    %v185 = vpop.f32.mrb[0].mxu0
    %186 = vmatprep.mubr.f32.mxu0 0.0
    %187 = vmatmul.mubr.f32.gmra.mrb[0].mxu0 %v73
    %v188 = vpop.f32.mrb[0].mxu0
    %v189 = vadd.f32 0.0, %v188
    %v190 = vpop.f32.mrb[0].mxu0
    %191 = vmatprep.mubr.f32.mxu0 0.0
    %192 = vmatmul.mubr.f32.gmra.mrb[0].mxu0 %v76
    %v193 = vpop.f32.mrb[0].mxu0
    %v194 = vadd.f32 0.0, %v193
    %v195 = vpop.f32.mrb[0].mxu0
    %196 = vmatprep.mubr.f32.mxu0 0.0
    %197 = vmatmul.mubr.f32.gmra.mrb[0].mxu0 %v79
    %v198 = vpop.f32.mrb[0].mxu0
    %v199 = vadd.f32 0.0, %v198
    %v200 = vpop.f32.mrb[0].mxu0
    %201 = vmatprep.mubr.f32.mxu0 0.0
    %202 = vmatmul.mubr.f32.gmra.mrb[0].mxu0 %v82
    %v203 = vpop.f32.mrb[0].mxu0
    %v204 = vadd.f32 0.0, %v203
    %v205 = vpop.f32.mrb[0].mxu0
    %206 = vmatprep.mubr.f32.mxu0 0.0
    %207 = vmatmul.mubr.f32.gmra.mrb[0].mxu0 %v85
    %v208 = vpop.f32.mrb[0].mxu0
    %v209 = vadd.f32 0.0, %v208
    %v210 = vpop.f32.mrb[0].mxu0
    %211 = vmatprep.mubr.f32.mxu0 0.0
    %212 = vmatmul.mubr.f32.gmra.mrb[0].mxu0 %v88
    %v213 = vpop.f32.mrb[0].mxu0
    %v214 = vadd.f32 0.0, %v213
    %v215 = vpop.f32.mrb[0].mxu0
    %216 = vmatprep.mubr.f32.mxu0 0.0
    %217 = vmatmul.mubr.f32.gmra.mrb[0].mxu0 %v91
    %v218 = vpop.f32.mrb[0].mxu0
    %v219 = vadd.f32 0.0, %v218
    %v220 = vpop.f32.mrb[0].mxu0
    %221 = vdwg.mxu0
    %v223 = vsel %vm68, %v44, 0
    %v226 = vsel %vm68, %v45, 0
    %v229 = vsel %vm68, %v46, 0
    %v232 = vsel %vm68, %v47, 0
    %v235 = vsel %vm68, %v48, 0
    %v238 = vsel %vm68, %v49, 0
    %v241 = vsel %vm68, %v50, 0
    %v244 = vsel %vm68, %v51, 0
    %v247 = vsel %vm68, %v60, 0
    %v250 = vsel %vm68, %v61, 0
    %v253 = vsel %vm68, %v62, 0
    %v256 = vsel %vm68, %v63, 0
    %v259 = vsel %vm68, %v64, 0
    %v262 = vsel %vm68, %v65, 0
    %v265 = vsel %vm68, %v66, 0
    %v268 = vsel %vm68, %v67, 0
    %270 = vmatprep.subr.mxu0 0.0
    %271 = vmatpush1.xpose.msra.mxu0 %v247
    %272 = vmatprep.subr.mxu0 0.0
    %273 = vmatpush1.xpose.msra.mxu0 %v250
    %274 = vmatprep.subr.mxu0 0.0
    %275 = vmatpush1.xpose.msra.mxu0 %v253
    %276 = vmatprep.subr.mxu0 0.0
    %277 = vmatpush1.xpose.msra.mxu0 %v256
    %278 = vmatprep.subr.mxu0 0.0
    %279 = vmatpush1.xpose.msra.mxu0 %v259
    %280 = vmatprep.subr.mxu0 0.0
    %281 = vmatpush1.xpose.msra.mxu0 %v262
    %282 = vmatprep.subr.mxu0 0.0
    %283 = vmatpush1.xpose.msra.mxu0 %v265
    %284 = vmatprep.subr.mxu0 0.0
    %285 = vmatpush1.xpose.msra.mxu0 %v268
    %286 = vmatprep.subr.mxu0 0.0
    %287 = vmatpush1.xpose.msra.mxu0 0.0
    %288 = vmatprep.subr.mxu0 0.0
    %289 = vmatpush1.xpose.msra.mxu0 0.0
    %290 = vmatprep.subr.mxu0 0.0
    %291 = vmatpush1.xpose.msra.mxu0 0.0
    %292 = vmatprep.subr.mxu0 0.0
    %293 = vmatpush1.xpose.msra.mxu0 0.0
    %294 = vmatprep.subr.mxu0 0.0
    %295 = vmatpush1.xpose.msra.mxu0 0.0
    %296 = vmatprep.subr.mxu0 0.0
    %297 = vmatpush1.xpose.msra.mxu0 0.0
    %298 = vmatprep.subr.mxu0 0.0
    %299 = vmatpush1.xpose.msra.mxu0 0.0
    %300 = vmatprep.subr.mxu0 0.0
    %301 = vmatpush1.xpose.msra.mxu0 0.0
    %302 = vmatprep.subr.mxu0 0.0
    %303 = vmatpush1.xpose.msra.mxu0 0.0
    %304 = vmatprep.subr.mxu0 0.0
    %305 = vmatpush1.xpose.msra.mxu0 0.0
    %306 = vmatprep.subr.mxu0 0.0
    %307 = vmatpush1.xpose.msra.mxu0 0.0
    %308 = vmatprep.subr.mxu0 0.0
    %309 = vmatpush1.xpose.msra.mxu0 0.0
    %310 = vmatprep.subr.mxu0 0.0
    %311 = vmatpush1.xpose.msra.mxu0 0.0
    %312 = vmatprep.subr.mxu0 0.0
    %313 = vmatpush1.xpose.msra.mxu0 0.0
    %314 = vmatprep.subr.mxu0 0.0
    %315 = vmatpush1.xpose.msra.mxu0 0.0
    %316 = vmatprep.subr.mxu0 0.0
    %317 = vmatpush1.xpose.msra.mxu0 0.0
    %318 = vmatprep.subr.mxu0 0.0
    %319 = vmatpush1.xpose.msra.mxu0 0.0
    %320 = vmatprep.subr.mxu0 0.0
    %321 = vmatpush1.xpose.msra.mxu0 0.0
    %322 = vmatprep.subr.mxu0 0.0
    %323 = vmatpush1.xpose.msra.mxu0 0.0
    %324 = vmatprep.subr.mxu0 0.0
    %325 = vmatpush1.xpose.msra.mxu0 0.0
    %326 = vmatprep.subr.mxu0 0.0
    %327 = vmatpush1.xpose.msra.mxu0 0.0
    %328 = vmatprep.subr.mxu0 0.0
    %329 = vmatpush1.xpose.msra.mxu0 0.0
    %330 = vmatprep.subr.mxu0 0.0
    %331 = vmatpush1.xpose.msra.mxu0 0.0
    %332 = vmatprep.subr.mxu0 0.0
    %333 = vmatpush1.xpose.msra.mxu0 0.0
    %334 = vmatprep.mubr.f32.mxu0 0.0
    %335 = vmatmul.mubr.f32.gmra.mrb[0].mxu0 %v223
    %v336 = vpop.f32.mrb[0].mxu0
    %v337 = vadd.f32 0.0, %v336
    %v338 = vpop.f32.mrb[0].mxu0
    %339 = vmatprep.mubr.f32.mxu0 0.0
    %340 = vmatmul.mubr.f32.gmra.mrb[0].mxu0 %v226
    %v341 = vpop.f32.mrb[0].mxu0
    %v342 = vadd.f32 0.0, %v341
    %v343 = vpop.f32.mrb[0].mxu0
    %344 = vmatprep.mubr.f32.mxu0 0.0
    %345 = vmatmul.mubr.f32.gmra.mrb[0].mxu0 %v229
    %v346 = vpop.f32.mrb[0].mxu0
    %v347 = vadd.f32 0.0, %v346
    %v348 = vpop.f32.mrb[0].mxu0
    %349 = vmatprep.mubr.f32.mxu0 0.0
    %350 = vmatmul.mubr.f32.gmra.mrb[0].mxu0 %v232
    %v351 = vpop.f32.mrb[0].mxu0
    %v352 = vadd.f32 0.0, %v351
    %v353 = vpop.f32.mrb[0].mxu0
    %354 = vmatprep.mubr.f32.mxu0 0.0
    %355 = vmatmul.mubr.f32.gmra.mrb[0].mxu0 %v235
    %v356 = vpop.f32.mrb[0].mxu0
    %v357 = vadd.f32 0.0, %v356
    %v358 = vpop.f32.mrb[0].mxu0
    %359 = vmatprep.mubr.f32.mxu0 0.0
    %360 = vmatmul.mubr.f32.gmra.mrb[0].mxu0 %v238
    %v361 = vpop.f32.mrb[0].mxu0
    %v362 = vadd.f32 0.0, %v361
    %v363 = vpop.f32.mrb[0].mxu0
    %364 = vmatprep.mubr.f32.mxu0 0.0
    %365 = vmatmul.mubr.f32.gmra.mrb[0].mxu0 %v241
    %v366 = vpop.f32.mrb[0].mxu0
    %v367 = vadd.f32 0.0, %v366
    %v368 = vpop.f32.mrb[0].mxu0
    %369 = vmatprep.mubr.f32.mxu0 0.0
    %370 = vmatmul.mubr.f32.gmra.mrb[0].mxu0 %v244
    %v371 = vpop.f32.mrb[0].mxu0
    %v372 = vadd.f32 0.0, %v371
    %v373 = vpop.f32.mrb[0].mxu0
    %374 = vdwg.mxu0
    %s375 = smul.u32 0, 64
    %s376 = smul.u32 0, 64
    %v377 = vlaneseq
    %v378 = vshrl.u32 %v377, 7
    %v379 = vadd.s32 %v378, 8
    %v380 = vadd.s32 %v378, 16
    %v381 = vadd.s32 %v378, 24
    %v382 = vadd.s32 %v378, 32
    %v383 = vadd.s32 %v378, 40
    %v384 = vadd.s32 %v378, 48
    %v385 = vadd.s32 %v378, 56
    %v386 = vstv %s375
    %v387 = vadd.s32 %v378, %v386
    %v388 = vadd.s32 %v379, %v386
    %v389 = vadd.s32 %v380, %v386
    %v390 = vadd.s32 %v381, %v386
    %v391 = vadd.s32 %v382, %v386
    %v392 = vadd.s32 %v383, %v386
    %v393 = vadd.s32 %v384, %v386
    %v394 = vadd.s32 %v385, %v386
    %v395 = vlaneseq
    %v396 = vand.u32 %v395, 127
    %v397 = vstv %s376
    %v398 = vadd.s32 %v396, %v397
    %vm399 = vcmp.eq.s32.totalorder %v387, %v398
    %vm400 = vcmp.eq.s32.totalorder %v388, %v398
    %vm401 = vcmp.eq.s32.totalorder %v389, %v398
    %vm402 = vcmp.eq.s32.totalorder %v390, %v398
    %vm403 = vcmp.eq.s32.totalorder %v391, %v398
    %vm404 = vcmp.eq.s32.totalorder %v392, %v398
    %vm405 = vcmp.eq.s32.totalorder %v393, %v398
    %vm406 = vcmp.eq.s32.totalorder %v394, %v398
    %v407 = vld [vmem:[#allocation4] sm:$0x3]
    %v408 = vsel %vm399, 1, 0
    %v409 = vsel %vm400, 1, 0
    %v410 = vsel %vm401, 1, 0
    %v411 = vsel %vm402, 1, 0
    %v412 = vsel %vm403, 1, 0
    %v413 = vsel %vm404, 1, 0
    %v414 = vsel %vm405, 1, 0
    %v415 = vsel %vm406, 1, 0
    %vm416 = vcmp.eq.s32.totalorder %v408, 1
    %vm417 = vcmp.eq.s32.totalorder %v409, 1
    %vm418 = vcmp.eq.s32.totalorder %v410, 1
    %vm419 = vcmp.eq.s32.totalorder %v411, 1
    %vm420 = vcmp.eq.s32.totalorder %v412, 1
    %vm421 = vcmp.eq.s32.totalorder %v413, 1
    %vm422 = vcmp.eq.s32.totalorder %v414, 1
    %vm423 = vcmp.eq.s32.totalorder %v415, 1
    %v424 = vsel %vm416, %v184, 0.0
    %v425 = vsel %vm417, %v189, 0.0
    %v426 = vsel %vm418, %v194, 0.0
    %v427 = vsel %vm419, %v199, 0.0
    %v428 = vsel %vm420, %v204, 0.0
    %v429 = vsel %vm421, %v209, 0.0
    %v430 = vsel %vm422, %v214, 0.0
    %v431 = vsel %vm423, %v219, 0.0
    %v432 = vsel %vm416, %v337, 0.0
    %v433 = vsel %vm417, %v342, 0.0
    %v434 = vsel %vm418, %v347, 0.0
    %v435 = vsel %vm419, %v352, 0.0
    %v436 = vsel %vm420, %v357, 0.0
    %v437 = vsel %vm421, %v362, 0.0
    %v438 = vsel %vm422, %v367, 0.0
    %v439 = vsel %vm423, %v372, 0.0
    %vm440 = vcmask 523264
    %v441 = vsel %vm440, %v424, 0.0
    %442 = vadd.xlane.f32.xlu0 %v441
    %v443 = vpop.xlane.xlu0 %442
    %v444 = vsel %vm440, %v425, 0.0
    %445 = vadd.xlane.f32.xlu0 %v444
    %v446 = vpop.xlane.xlu0 %445
    %v447 = vsel %vm440, %v426, 0.0
    %448 = vadd.xlane.f32.xlu0 %v447
    %v449 = vpop.xlane.xlu0 %448
    %v450 = vsel %vm440, %v427, 0.0
    %451 = vadd.xlane.f32.xlu0 %v450
    %v452 = vpop.xlane.xlu0 %451
    %v453 = vsel %vm440, %v428, 0.0
    %454 = vadd.xlane.f32.xlu0 %v453
    %v455 = vpop.xlane.xlu0 %454
    %v456 = vsel %vm440, %v429, 0.0
    %457 = vadd.xlane.f32.xlu0 %v456
    %v458 = vpop.xlane.xlu0 %457
    %v459 = vsel %vm440, %v430, 0.0
    %460 = vadd.xlane.f32.xlu0 %v459
    %v461 = vpop.xlane.xlu0 %460
    %v462 = vsel %vm440, %v431, 0.0
    %463 = vadd.xlane.f32.xlu0 %v462
    %v464 = vpop.xlane.xlu0 %463
    %v465 = vsel %vm440, %v432, 0.0
    %466 = vadd.xlane.f32.xlu0 %v465
    %v467 = vpop.xlane.xlu0 %466
    %v468 = vsel %vm440, %v433, 0.0
    %469 = vadd.xlane.f32.xlu0 %v468
    %v470 = vpop.xlane.xlu0 %469
    %v471 = vsel %vm440, %v434, 0.0
    %472 = vadd.xlane.f32.xlu0 %v471
    %v473 = vpop.xlane.xlu0 %472
    %v474 = vsel %vm440, %v435, 0.0
    %475 = vadd.xlane.f32.xlu0 %v474
    %v476 = vpop.xlane.xlu0 %475
    %v477 = vsel %vm440, %v436, 0.0
    %478 = vadd.xlane.f32.xlu0 %v477
    %v479 = vpop.xlane.xlu0 %478
    %v480 = vsel %vm440, %v437, 0.0
    %481 = vadd.xlane.f32.xlu0 %v480
    %v482 = vpop.xlane.xlu0 %481
    %v483 = vsel %vm440, %v438, 0.0
    %484 = vadd.xlane.f32.xlu0 %v483
    %v485 = vpop.xlane.xlu0 %484
    %v486 = vsel %vm440, %v439, 0.0
    %487 = vadd.xlane.f32.xlu0 %v486
    %v488 = vpop.xlane.xlu0 %487
    %v505 = vlaneseq
    %v506 = vshrl.u32 %v505, 7
    %v507 = vsub.s32 %v396, %v506
    %v508 = vrot.slane %v443, %v507
    %v509 = vadd.s32 %v396, 4294967288
    %v510 = vlaneseq
    %v511 = vshrl.u32 %v510, 7
    %v512 = vsub.s32 %v509, %v511
    %v513 = vrot.slane %v446, %v512
    %vm514 = vcmask 130112
    %v515 = vsel %vm514, %v513, %v508
    %v516 = vadd.s32 %v396, 4294967280
    %v517 = vlaneseq
    %v518 = vshrl.u32 %v517, 7
    %v519 = vsub.s32 %v516, %v518
    %v520 = vrot.slane %v449, %v519
    %vm521 = vcmask 195712
    %v522 = vsel %vm521, %v520, %v515
    %v523 = vadd.s32 %v396, 4294967272
    %v524 = vlaneseq
    %v525 = vshrl.u32 %v524, 7
    %v526 = vsub.s32 %v523, %v525
    %v527 = vrot.slane %v452, %v526
    %vm528 = vcmask 261312
    %v529 = vsel %vm528, %v527, %v522
    %v530 = vadd.s32 %v396, 4294967264
    %v531 = vlaneseq
    %v532 = vshrl.u32 %v531, 7
    %v533 = vsub.s32 %v530, %v532
    %v534 = vrot.slane %v455, %v533
    %vm535 = vcmask 326912
    %v536 = vsel %vm535, %v534, %v529
    %v537 = vadd.s32 %v396, 4294967256
    %v538 = vlaneseq
    %v539 = vshrl.u32 %v538, 7
    %v540 = vsub.s32 %v537, %v539
    %v541 = vrot.slane %v458, %v540
    %vm542 = vcmask 392512
    %v543 = vsel %vm542, %v541, %v536
    %v544 = vadd.s32 %v396, 4294967248
    %v545 = vlaneseq
    %v546 = vshrl.u32 %v545, 7
    %v547 = vsub.s32 %v544, %v546
    %v548 = vrot.slane %v461, %v547
    %vm549 = vcmask 458112
    %v550 = vsel %vm549, %v548, %v543
    %v551 = vadd.s32 %v396, 4294967240
    %v552 = vlaneseq
    %v553 = vshrl.u32 %v552, 7
    %v554 = vsub.s32 %v551, %v553
    %v555 = vrot.slane %v464, %v554
    %vm556 = vcmask 523712
    %v557 = vsel %vm556, %v555, %v550
    %v558 = vlaneseq
    %v559 = vshrl.u32 %v558, 7
    %v560 = vsub.s32 %v396, %v559
    %v561 = vrot.slane %v467, %v560
    %v562 = vlaneseq
    %v563 = vshrl.u32 %v562, 7
    %v564 = vsub.s32 %v509, %v563
    %v565 = vrot.slane %v470, %v564
    %v566 = vsel %vm514, %v565, %v561
    %v567 = vlaneseq
    %v568 = vshrl.u32 %v567, 7
    %v569 = vsub.s32 %v516, %v568
    %v570 = vrot.slane %v473, %v569
    %v571 = vsel %vm521, %v570, %v566
    %v572 = vlaneseq
    %v573 = vshrl.u32 %v572, 7
    %v574 = vsub.s32 %v523, %v573
    %v575 = vrot.slane %v476, %v574
    %v576 = vsel %vm528, %v575, %v571
    %v577 = vlaneseq
    %v578 = vshrl.u32 %v577, 7
    %v579 = vsub.s32 %v530, %v578
    %v580 = vrot.slane %v479, %v579
    %v581 = vsel %vm535, %v580, %v576
    %v582 = vlaneseq
    %v583 = vshrl.u32 %v582, 7
    %v584 = vsub.s32 %v537, %v583
    %v585 = vrot.slane %v482, %v584
    %v586 = vsel %vm542, %v585, %v581
    %v587 = vlaneseq
    %v588 = vshrl.u32 %v587, 7
    %v589 = vsub.s32 %v544, %v588
    %v590 = vrot.slane %v485, %v589
    %v591 = vsel %vm549, %v590, %v586
    %v592 = vlaneseq
    %v593 = vshrl.u32 %v592, 7
    %v594 = vsub.s32 %v551, %v593
    %v595 = vrot.slane %v488, %v594
    %v596 = vsel %vm556, %v595, %v591
    %vm597 = vcmask 1041409
    %v598 = vsel %vm597, %v596, %v557
    %v600 = vadd.f32 %v407, %v598
    %vm601 = vcmask 517120
    %602 = vst.msk [vmem:[#allocation4] sm:$0x3] %vm601, %v600
    %v603 = vsel %vm416, -142.85715, %v184
    %v604 = vsel %vm417, -142.85715, %v189
    %v605 = vsel %vm418, -142.85715, %v194
    %v606 = vsel %vm419, -142.85715, %v199
    %v607 = vsel %vm420, -142.85715, %v204
    %v608 = vsel %vm421, -142.85715, %v209
    %v609 = vsel %vm422, -142.85715, %v214
    %v610 = vsel %vm423, -142.85715, %v219
    %v611 = vsel %vm416, -142.85715, %v337
    %v612 = vsel %vm417, -142.85715, %v342
    %v613 = vsel %vm418, -142.85715, %v347
    %v614 = vsel %vm419, -142.85715, %v352
    %v615 = vsel %vm420, -142.85715, %v357
    %v616 = vsel %vm421, -142.85715, %v362
    %v617 = vsel %vm422, -142.85715, %v367
    %v618 = vsel %vm423, -142.85715, %v372
    %v619 = vld [vmem:[#allocation2] sm:$0x3]
    %v620 = vsel %vm440, %v603, -inf
    %621 = vmax.xlane.f32.xlu0 %v620
    %v622 = vpop.xlane.xlu0 %621
    %v623 = vsel %vm440, %v604, -inf
    %624 = vmax.xlane.f32.xlu0 %v623
    %v625 = vpop.xlane.xlu0 %624
    %v626 = vsel %vm440, %v605, -inf
    %627 = vmax.xlane.f32.xlu0 %v626
    %v628 = vpop.xlane.xlu0 %627
    %v629 = vsel %vm440, %v606, -inf
    %630 = vmax.xlane.f32.xlu0 %v629
    %v631 = vpop.xlane.xlu0 %630
    %v632 = vsel %vm440, %v607, -inf
    %633 = vmax.xlane.f32.xlu0 %v632
    %v634 = vpop.xlane.xlu0 %633
    %v635 = vsel %vm440, %v608, -inf
    %636 = vmax.xlane.f32.xlu0 %v635
    %v637 = vpop.xlane.xlu0 %636
    %v638 = vsel %vm440, %v609, -inf
    %639 = vmax.xlane.f32.xlu0 %v638
    %v640 = vpop.xlane.xlu0 %639
    %v641 = vsel %vm440, %v610, -inf
    %642 = vmax.xlane.f32.xlu0 %v641
    %v643 = vpop.xlane.xlu0 %642
    %v644 = vsel %vm440, %v611, -inf
    %645 = vmax.xlane.f32.xlu0 %v644
    %v646 = vpop.xlane.xlu0 %645
    %v647 = vsel %vm440, %v612, -inf
    %648 = vmax.xlane.f32.xlu0 %v647
    %v649 = vpop.xlane.xlu0 %648
    %v650 = vsel %vm440, %v613, -inf
    %651 = vmax.xlane.f32.xlu0 %v650
    %v652 = vpop.xlane.xlu0 %651
    %v653 = vsel %vm440, %v614, -inf
    %654 = vmax.xlane.f32.xlu0 %v653
    %v655 = vpop.xlane.xlu0 %654
    %v656 = vsel %vm440, %v615, -inf
    %657 = vmax.xlane.f32.xlu0 %v656
    %v658 = vpop.xlane.xlu0 %657
    %v659 = vsel %vm440, %v616, -inf
    %660 = vmax.xlane.f32.xlu0 %v659
    %v661 = vpop.xlane.xlu0 %660
    %v662 = vsel %vm440, %v617, -inf
    %663 = vmax.xlane.f32.xlu0 %v662
    %v664 = vpop.xlane.xlu0 %663
    %v665 = vsel %vm440, %v618, -inf
    %666 = vmax.xlane.f32.xlu0 %v665
    %v667 = vpop.xlane.xlu0 %666
    %v684 = vlaneseq
    %v685 = vshrl.u32 %v684, 7
    %v686 = vsub.s32 %v396, %v685
    %v687 = vrot.slane %v622, %v686
    %v688 = vlaneseq
    %v689 = vshrl.u32 %v688, 7
    %v690 = vsub.s32 %v509, %v689
    %v691 = vrot.slane %v625, %v690
    %v692 = vsel %vm514, %v691, %v687
    %v693 = vlaneseq
    %v694 = vshrl.u32 %v693, 7
    %v695 = vsub.s32 %v516, %v694
    %v696 = vrot.slane %v628, %v695
    %v697 = vsel %vm521, %v696, %v692
    %v698 = vlaneseq
    %v699 = vshrl.u32 %v698, 7
    %v700 = vsub.s32 %v523, %v699
    %v701 = vrot.slane %v631, %v700
    %v702 = vsel %vm528, %v701, %v697
    %v703 = vlaneseq
    %v704 = vshrl.u32 %v703, 7
    %v705 = vsub.s32 %v530, %v704
    %v706 = vrot.slane %v634, %v705
    %v707 = vsel %vm535, %v706, %v702
    %v708 = vlaneseq
    %v709 = vshrl.u32 %v708, 7
    %v710 = vsub.s32 %v537, %v709
    %v711 = vrot.slane %v637, %v710
    %v712 = vsel %vm542, %v711, %v707
    %v713 = vlaneseq
    %v714 = vshrl.u32 %v713, 7
    %v715 = vsub.s32 %v544, %v714
    %v716 = vrot.slane %v640, %v715
    %v717 = vsel %vm549, %v716, %v712
    %v718 = vlaneseq
    %v719 = vshrl.u32 %v718, 7
    %v720 = vsub.s32 %v551, %v719
    %v721 = vrot.slane %v643, %v720
    %v722 = vsel %vm556, %v721, %v717
    %v723 = vlaneseq
    %v724 = vshrl.u32 %v723, 7
    %v725 = vsub.s32 %v396, %v724
    %v726 = vrot.slane %v646, %v725
    %v727 = vlaneseq
    %v728 = vshrl.u32 %v727, 7
    %v729 = vsub.s32 %v509, %v728
    %v730 = vrot.slane %v649, %v729
    %v731 = vsel %vm514, %v730, %v726
    %v732 = vlaneseq
    %v733 = vshrl.u32 %v732, 7
    %v734 = vsub.s32 %v516, %v733
    %v735 = vrot.slane %v652, %v734
    %v736 = vsel %vm521, %v735, %v731
    %v737 = vlaneseq
    %v738 = vshrl.u32 %v737, 7
    %v739 = vsub.s32 %v523, %v738
    %v740 = vrot.slane %v655, %v739
    %v741 = vsel %vm528, %v740, %v736
    %v742 = vlaneseq
    %v743 = vshrl.u32 %v742, 7
    %v744 = vsub.s32 %v530, %v743
    %v745 = vrot.slane %v658, %v744
    %v746 = vsel %vm535, %v745, %v741
    %v747 = vlaneseq
    %v748 = vshrl.u32 %v747, 7
    %v749 = vsub.s32 %v537, %v748
    %v750 = vrot.slane %v661, %v749
    %v751 = vsel %vm542, %v750, %v746
    %v752 = vlaneseq
    %v753 = vshrl.u32 %v752, 7
    %v754 = vsub.s32 %v544, %v753
    %v755 = vrot.slane %v664, %v754
    %v756 = vsel %vm549, %v755, %v751
    %v757 = vlaneseq
    %v758 = vshrl.u32 %v757, 7
    %v759 = vsub.s32 %v551, %v758
    %v760 = vrot.slane %v667, %v759
    %v761 = vsel %vm556, %v760, %v756
    %v762 = vsel %vm597, %v761, %v722
    %v764 = vmax.f32 %v619, %v762
    %v765 = vld [vmem:[#allocation3] sm:$0x3]
    %v766 = vsub.f32 %v619, %v764
    %v767 = vmul.f32 %v766, 1.442695
    %v768 = vpow.pop %v767
    %v769 = vmul.f32 %v765, %v768
    %v770 = vlaneseq
    %v771 = vshrl.u32 %v770, 7
    %v772 = vsub.s32 0, %v771
    %v773 = vrot.slane %v764, %v772
    %775 = vbcast.lane.b32.xlu0 %v773, 256
    %v776 = vpop.permute.xlu0 %775
    %s778 = sor.u32 256, 8
    %779 = vbcast.lane.b32.xlu0 %v773, %s778
    %v780 = vpop.permute.xlu0 %779
    %s782 = sor.u32 256, 16
    %783 = vbcast.lane.b32.xlu0 %v773, %s782
    %v784 = vpop.permute.xlu0 %783
    %s786 = sor.u32 256, 24
    %787 = vbcast.lane.b32.xlu0 %v773, %s786
    %v788 = vpop.permute.xlu0 %787
    %s790 = sor.u32 256, 32
    %791 = vbcast.lane.b32.xlu0 %v773, %s790
    %v792 = vpop.permute.xlu0 %791
    %s794 = sor.u32 256, 40
    %795 = vbcast.lane.b32.xlu0 %v773, %s794
    %v796 = vpop.permute.xlu0 %795
    %s798 = sor.u32 256, 48
    %799 = vbcast.lane.b32.xlu0 %v773, %s798
    %v800 = vpop.permute.xlu0 %799
    %s802 = sor.u32 256, 56
    %803 = vbcast.lane.b32.xlu0 %v773, %s802
    %v804 = vpop.permute.xlu0 %803
    %v805 = vlaneseq
    %v806 = vshrl.u32 %v805, 7
    %v807 = vsub.s32 1, %v806
    %v808 = vrot.slane %v764, %v807
    %810 = vbcast.lane.b32.xlu0 %v808, 256
    %v811 = vpop.permute.xlu0 %810
    %s813 = sor.u32 256, 8
    %814 = vbcast.lane.b32.xlu0 %v808, %s813
    %v815 = vpop.permute.xlu0 %814
    %s817 = sor.u32 256, 16
    %818 = vbcast.lane.b32.xlu0 %v808, %s817
    %v819 = vpop.permute.xlu0 %818
    %s821 = sor.u32 256, 24
    %822 = vbcast.lane.b32.xlu0 %v808, %s821
    %v823 = vpop.permute.xlu0 %822
    %s825 = sor.u32 256, 32
    %826 = vbcast.lane.b32.xlu0 %v808, %s825
    %v827 = vpop.permute.xlu0 %826
    %s829 = sor.u32 256, 40
    %830 = vbcast.lane.b32.xlu0 %v808, %s829
    %v831 = vpop.permute.xlu0 %830
    %s833 = sor.u32 256, 48
    %834 = vbcast.lane.b32.xlu0 %v808, %s833
    %v835 = vpop.permute.xlu0 %834
    %s837 = sor.u32 256, 56
    %838 = vbcast.lane.b32.xlu0 %v808, %s837
    %v839 = vpop.permute.xlu0 %838
    %v840 = vsub.f32 %v603, %v776
    %v841 = vsub.f32 %v604, %v780
    %v842 = vsub.f32 %v605, %v784
    %v843 = vsub.f32 %v606, %v788
    %v844 = vsub.f32 %v607, %v792
    %v845 = vsub.f32 %v608, %v796
    %v846 = vsub.f32 %v609, %v800
    %v847 = vsub.f32 %v610, %v804
    %v848 = vsub.f32 %v611, %v811
    %v849 = vsub.f32 %v612, %v815
    %v850 = vsub.f32 %v613, %v819
    %v851 = vsub.f32 %v614, %v823
    %v852 = vsub.f32 %v615, %v827
    %v853 = vsub.f32 %v616, %v831
    %v854 = vsub.f32 %v617, %v835
    %v855 = vsub.f32 %v618, %v839
    %v856 = vmul.f32 %v840, 1.442695
    %v857 = vpow.pop %v856
    %v858 = vmul.f32 %v841, 1.442695
    %v859 = vpow.pop %v858
    %v860 = vmul.f32 %v842, 1.442695
    %v861 = vpow.pop %v860
    %v862 = vmul.f32 %v843, 1.442695
    %v863 = vpow.pop %v862
    %v864 = vmul.f32 %v844, 1.442695
    %v865 = vpow.pop %v864
    %v866 = vmul.f32 %v845, 1.442695
    %v867 = vpow.pop %v866
    %v868 = vmul.f32 %v846, 1.442695
    %v869 = vpow.pop %v868
    %v870 = vmul.f32 %v847, 1.442695
    %v871 = vpow.pop %v870
    %v872 = vmul.f32 %v848, 1.442695
    %v873 = vpow.pop %v872
    %v874 = vmul.f32 %v849, 1.442695
    %v875 = vpow.pop %v874
    %v876 = vmul.f32 %v850, 1.442695
    %v877 = vpow.pop %v876
    %v878 = vmul.f32 %v851, 1.442695
    %v879 = vpow.pop %v878
    %v880 = vmul.f32 %v852, 1.442695
    %v881 = vpow.pop %v880
    %v882 = vmul.f32 %v853, 1.442695
    %v883 = vpow.pop %v882
    %v884 = vmul.f32 %v854, 1.442695
    %v885 = vpow.pop %v884
    %v886 = vmul.f32 %v855, 1.442695
    %v887 = vpow.pop %v886
    %v888 = vsel %vm440, %v857, 0.0
    %889 = vadd.xlane.f32.xlu0 %v888
    %v890 = vpop.xlane.xlu0 %889
    %v891 = vsel %vm440, %v859, 0.0
    %892 = vadd.xlane.f32.xlu0 %v891
    %v893 = vpop.xlane.xlu0 %892
    %v894 = vsel %vm440, %v861, 0.0
    %895 = vadd.xlane.f32.xlu0 %v894
    %v896 = vpop.xlane.xlu0 %895
    %v897 = vsel %vm440, %v863, 0.0
    %898 = vadd.xlane.f32.xlu0 %v897
    %v899 = vpop.xlane.xlu0 %898
    %v900 = vsel %vm440, %v865, 0.0
    %901 = vadd.xlane.f32.xlu0 %v900
    %v902 = vpop.xlane.xlu0 %901
    %v903 = vsel %vm440, %v867, 0.0
    %904 = vadd.xlane.f32.xlu0 %v903
    %v905 = vpop.xlane.xlu0 %904
    %v906 = vsel %vm440, %v869, 0.0
    %907 = vadd.xlane.f32.xlu0 %v906
    %v908 = vpop.xlane.xlu0 %907
    %v909 = vsel %vm440, %v871, 0.0
    %910 = vadd.xlane.f32.xlu0 %v909
    %v911 = vpop.xlane.xlu0 %910
    %v912 = vsel %vm440, %v873, 0.0
    %913 = vadd.xlane.f32.xlu0 %v912
    %v914 = vpop.xlane.xlu0 %913
    %v915 = vsel %vm440, %v875, 0.0
    %916 = vadd.xlane.f32.xlu0 %v915
    %v917 = vpop.xlane.xlu0 %916
    %v918 = vsel %vm440, %v877, 0.0
    %919 = vadd.xlane.f32.xlu0 %v918
    %v920 = vpop.xlane.xlu0 %919
    %v921 = vsel %vm440, %v879, 0.0
    %922 = vadd.xlane.f32.xlu0 %v921
    %v923 = vpop.xlane.xlu0 %922
    %v924 = vsel %vm440, %v881, 0.0
    %925 = vadd.xlane.f32.xlu0 %v924
    %v926 = vpop.xlane.xlu0 %925
    %v927 = vsel %vm440, %v883, 0.0
    %928 = vadd.xlane.f32.xlu0 %v927
    %v929 = vpop.xlane.xlu0 %928
    %v930 = vsel %vm440, %v885, 0.0
    %931 = vadd.xlane.f32.xlu0 %v930
    %v932 = vpop.xlane.xlu0 %931
    %v933 = vsel %vm440, %v887, 0.0
    %934 = vadd.xlane.f32.xlu0 %v933
    %v935 = vpop.xlane.xlu0 %934
    %v952 = vlaneseq
    %v953 = vshrl.u32 %v952, 7
    %v954 = vsub.s32 %v396, %v953
    %v955 = vrot.slane %v890, %v954
    %v956 = vlaneseq
    %v957 = vshrl.u32 %v956, 7
    %v958 = vsub.s32 %v509, %v957
    %v959 = vrot.slane %v893, %v958
    %v960 = vsel %vm514, %v959, %v955
    %v961 = vlaneseq
    %v962 = vshrl.u32 %v961, 7
    %v963 = vsub.s32 %v516, %v962
    %v964 = vrot.slane %v896, %v963
    %v965 = vsel %vm521, %v964, %v960
    %v966 = vlaneseq
    %v967 = vshrl.u32 %v966, 7
    %v968 = vsub.s32 %v523, %v967
    %v969 = vrot.slane %v899, %v968
    %v970 = vsel %vm528, %v969, %v965
    %v971 = vlaneseq
    %v972 = vshrl.u32 %v971, 7
    %v973 = vsub.s32 %v530, %v972
    %v974 = vrot.slane %v902, %v973
    %v975 = vsel %vm535, %v974, %v970
    %v976 = vlaneseq
    %v977 = vshrl.u32 %v976, 7
    %v978 = vsub.s32 %v537, %v977
    %v979 = vrot.slane %v905, %v978
    %v980 = vsel %vm542, %v979, %v975
    %v981 = vlaneseq
    %v982 = vshrl.u32 %v981, 7
    %v983 = vsub.s32 %v544, %v982
    %v984 = vrot.slane %v908, %v983
    %v985 = vsel %vm549, %v984, %v980
    %v986 = vlaneseq
    %v987 = vshrl.u32 %v986, 7
    %v988 = vsub.s32 %v551, %v987
    %v989 = vrot.slane %v911, %v988
    %v990 = vsel %vm556, %v989, %v985
    %v991 = vlaneseq
    %v992 = vshrl.u32 %v991, 7
    %v993 = vsub.s32 %v396, %v992
    %v994 = vrot.slane %v914, %v993
    %v995 = vlaneseq
    %v996 = vshrl.u32 %v995, 7
    %v997 = vsub.s32 %v509, %v996
    %v998 = vrot.slane %v917, %v997
    %v999 = vsel %vm514, %v998, %v994
    %v1000 = vlaneseq
    %v1001 = vshrl.u32 %v1000, 7
    %v1002 = vsub.s32 %v516, %v1001
    %v1003 = vrot.slane %v920, %v1002
    %v1004 = vsel %vm521, %v1003, %v999
    %v1005 = vlaneseq
    %v1006 = vshrl.u32 %v1005, 7
    %v1007 = vsub.s32 %v523, %v1006
    %v1008 = vrot.slane %v923, %v1007
    %v1009 = vsel %vm528, %v1008, %v1004
    %v1010 = vlaneseq
    %v1011 = vshrl.u32 %v1010, 7
    %v1012 = vsub.s32 %v530, %v1011
    %v1013 = vrot.slane %v926, %v1012
    %v1014 = vsel %vm535, %v1013, %v1009
    %v1015 = vlaneseq
    %v1016 = vshrl.u32 %v1015, 7
    %v1017 = vsub.s32 %v537, %v1016
    %v1018 = vrot.slane %v929, %v1017
    %v1019 = vsel %vm542, %v1018, %v1014
    %v1020 = vlaneseq
    %v1021 = vshrl.u32 %v1020, 7
    %v1022 = vsub.s32 %v544, %v1021
    %v1023 = vrot.slane %v932, %v1022
    %v1024 = vsel %vm549, %v1023, %v1019
    %v1025 = vlaneseq
    %v1026 = vshrl.u32 %v1025, 7
    %v1027 = vsub.s32 %v551, %v1026
    %v1028 = vrot.slane %v935, %v1027
    %v1029 = vsel %vm556, %v1028, %v1024
    %v1030 = vsel %vm597, %v1029, %v990
    %v1032 = vadd.f32 %v769, %v1030
    %1033 = vst.msk [vmem:[#allocation3] sm:$0x3] %vm601, %v1032
    %1034 = vst.msk [vmem:[#allocation2] sm:$0x3] %vm601, %v764
    // Predicated region
    $region14: #{tpu_custom_call.1} parent=1 // pred_check
      %p1035 = pneg %p12
    $region15: #{tpu_custom_call.1} parent=1 // pred_check_branch
      %1037 = sbr.rel (%p1035) target = $region17
    $region16: #{tpu_custom_call.1} parent=1 // pred_region
      %v1038 = vld [vmem:[#allocation4] sm:$0x3]
      %v1039 = vld [vmem:[#allocation2] sm:$0x3]
      %v1040 = vmax.f32 %v1039, %v1038
      %v1041 = vld [vmem:[#allocation3] sm:$0x3]
      %v1042 = vsub.f32 %v1039, %v1040
      %v1043 = vmul.f32 %v1042, 1.442695
      %v1044 = vpow.pop %v1043
      %v1045 = vmul.f32 %v1041, %v1044
      %v1046 = vsub.f32 %v1038, %v1040
      %v1047 = vmul.f32 %v1046, 1.442695
      %v1048 = vpow.pop %v1047
      %v1049 = vadd.f32 %v1045, %v1048
      %v1050 = vlog2.pop %v1049
      %v1051 = vmul.f32 %v1050, 0.6931472
      %v1052 = vadd.f32 %v1040, %v1051
      %v1053 = vsub.f32 %v1052, %v1038
      %v1056 = vunpack.c.l.s4 1966171168
      %v1057 = vunpack.c.0.s8 %v1056
      %v1058 = vlaneseq
      %v1059 = vshrl.u32 %v1058, 7
      %v1060 = vsub.s32 %v1057, %v1059
      %v1061 = vrot.slane %v1053, %v1060
      %v1062 = vcombine.high %v1061, %v1061
      %v1064 = vunpack.c.l.s4 1966171168
      %v1065 = vunpack.c.0.s8 %v1064
      %v1066 = vlaneseq
      %v1067 = vshrl.u32 %v1066, 7
      %v1068 = vsub.s32 %v1065, %v1067
      %v1069 = vrot.slane %v1061, %v1068
      %v1071 = vunpack.c.l.s4 1966171168
      %v1072 = vunpack.c.0.s8 %v1071
      %v1073 = vlaneseq
      %v1074 = vshrl.u32 %v1073, 7
      %v1075 = vsub.s32 %v1072, %v1074
      %v1076 = vrot.slane %v1062, %v1075
      %vm1079 = vcmask 516096
      %1080 = vst.msk [vmem:[#allocation5] sm:$0x1] %vm1079, %v1069
      %1081 = vst.msk [vmem:[#allocation5 + $0x1] sm:$0x1] %vm1079, %v1076
    $region17: #{tpu_custom_call.1} parent=1 // pred_fallthru
      _
    // Predicated region
    $region18: #{tpu_custom_call.1} parent=1 // pred_check
      _
    $region19: #{tpu_custom_call.1} parent=1 // pred_check_branch
      %1083 = sbr.rel (0) target = $region21
    $region20: #{tpu_custom_call.1} parent=1 // pred_region
      %s1085 = ssub.s32 32, 32
      %1086 = vsyncadd [#allocation6], %s1085
      %s1087 = sshll.u32 [#allocation5], 4
      %s1088 = int_to_ptr.vmem [resolvable:$true] %s1087
      %1093 = dma.vmem_to_hbm [thread:$0]  %s1088, 32, %s2, [#allocation6], 16, 16, 1
    $region21: #{tpu_custom_call.1} parent=1 // pred_fallthru
      _
    // Predicated region
    $region22: #{tpu_custom_call.1} parent=1 // pred_check
      _
    $region23: #{tpu_custom_call.1} parent=1 // pred_check_branch
      %1095 = sbr.rel (0) target = $region25
    $region24: #{tpu_custom_call.1} parent=1 // pred_region
      %1096 = dma.done [#allocation6], 32
    $region25: #{tpu_custom_call.1} parent=1 // pred_fallthru
      _
    %1097 = vsyncpa [#allocation6], 1

</llo_original>
